<compile_context>
chip_gen: v6e
topology: v6e:2x2x1
jax: 0.10.0
libtpu: 0.0.40
codegen_flags: <defaults>
</compile_context>

<pallas_src>
import math

import jax
import jax.numpy as jnp
from jax.experimental import pallas as pl
from jax.experimental.pallas import tpu as pltpu


def _copy_kernel(x_ref, o_ref):
    # Identity copy of the current tile.
    o_ref[...] = x_ref[...]


def _packed_sublanes(dtype) -> int:
    # Native packed sublane count: 8 for 32-bit, 16 for 16-bit, 32 for 8-bit dtypes.
    itemsize = jnp.dtype(dtype).itemsize
    return max(8, 8 * (4 // max(1, itemsize)))


_TARGET_TILE_BYTES = 1 << 20   # ~1 MiB per tile: inside the measured 0.5-2 MiB sweet spot.
_VMEM_BUDGET_BYTES = 8 << 20   # 2 bufs x (in + out) x tile <= 8 MiB -> safe even on v7x (64 MiB VMEM).


def _tiled_copy_2d(x2d, tile_rows: int):
    """Tiled identity copy of a (rows, 128) array; rows % tile_rows == 0."""
    rows, cols = x2d.shape
    grid = (rows // tile_rows,)
    return pl.pallas_call(
        _copy_kernel,
        out_shape=jax.ShapeDtypeStruct((rows, cols), x2d.dtype),
        grid=grid,
        in_specs=[pl.BlockSpec((tile_rows, cols), lambda i: (i, 0))],
        out_specs=pl.BlockSpec((tile_rows, cols), lambda i: (i, 0)),
        compiler_params=pltpu.CompilerParams(
            dimension_semantics=("parallel",),
            vmem_limit_bytes=32 << 20,  # explicit headroom; <= scoped defaults everywhere
        ),
    )(x2d)


def _full_block_copy(x2d):
    """Single-block identity copy (block == full array dims).  Only used for
    small tails / ragged remainders, so VMEM pressure is negligible."""
    rows, cols = x2d.shape
    return pl.pallas_call(
        _copy_kernel,
        out_shape=jax.ShapeDtypeStruct((rows, cols), x2d.dtype),
        grid=(1,),
        in_specs=[pl.BlockSpec((rows, cols), lambda i: (0, 0))],
        out_specs=pl.BlockSpec((rows, cols), lambda i: (0, 0)),
        compiler_params=pltpu.CompilerParams(dimension_semantics=("parallel",)),
    )(x2d)


def _identity_copy_pallas(x):
    """Pallas identity copy of an arbitrary-shaped array (main tiled region + small tails)."""
    shape = x.shape
    total = math.prod(shape) if x.ndim > 0 else 1
    if total == 0:
        return x

    flat = jnp.reshape(x, (total,))
    itemsize = jnp.dtype(x.dtype).itemsize
    packing = _packed_sublanes(x.dtype)

    pieces = []
    main_elems = (total // 128) * 128

    if main_elems > 0:
        rows = main_elems // 128
        bytes_per_row = 128 * itemsize
        # Largest packed-aligned tile that hits ~1 MiB and respects the VMEM budget.
        target_rows = max(packing, _TARGET_TILE_BYTES // bytes_per_row)
        cap_rows = max(packing, _VMEM_BUDGET_BYTES // (4 * bytes_per_row))
        tile_rows = min(target_rows, cap_rows)
        tile_rows = max(packing, (tile_rows // packing) * packing)
        max_tile = (rows // packing) * packing
        if max_tile >= packing:
            tile_rows = min(tile_rows, max_tile)

        aligned_rows = (rows // tile_rows) * tile_rows
        if aligned_rows > 0:
            main2d = jnp.reshape(flat[: aligned_rows * 128], (aligned_rows, 128))
            pieces.append(jnp.reshape(_tiled_copy_2d(main2d, tile_rows), (-1,)))
        if aligned_rows < rows:
            # Row remainder: still lane-dense (cols = 128), small single full-array block.
            rem2d = jnp.reshape(
                flat[aligned_rows * 128 : rows * 128], (rows - aligned_rows, 128)
            )
            pieces.append(jnp.reshape(_full_block_copy(rem2d), (-1,)))

    if main_elems < total:
        # Ragged tail (< 128 elements): tiny single full-array block.
        tail2d = jnp.reshape(flat[main_elems:], (1, total - main_elems))
        pieces.append(jnp.reshape(_full_block_copy(tail2d), (-1,)))

    out_flat = pieces[0] if len(pieces) == 1 else jnp.concatenate(pieces)
    return jnp.reshape(out_flat, shape)


def get_arg(*args, index: int, materialize: bool = False):
    """Equivalent of refiners' GetArg(index).forward(*args) -> args[index].

    Default path: pure selection, no kernel, zero HBM traffic (the optimal
    implementation per the perf review).  `materialize=True` opts into a
    Pallas identity-copy kernel that returns a freshly written buffer.
    """
    y = args[index]
    if not materialize:
        return y
    return _identity_copy_pallas(y)


if __name__ == "__main__":
    key = jax.random.PRNGKey(0)
    k0, k1, k2 = jax.random.split(key, 3)

    # Small deterministic example inputs (NCHW-style plus assorted shapes).
    a = jax.random.normal(k0, (2, 4, 16, 16), dtype=jnp.float32)  # 2048 elems: lane-aligned path
    b = jax.random.normal(k1, (2, 8, 32), dtype=jnp.float32)      # 512 elems
    c = jax.random.normal(k2, (3, 5, 7), dtype=jnp.float32)       # 105 elems: ragged tail path

    # Default GetArg semantics: metadata-only selection, no kernel launched.
    y1 = get_arg(a, b, c, index=1)
    y1 = jax.block_until_ready(y1)
    assert y1.shape == b.shape
    assert jnp.array_equal(y1, b)

    # Opt-in Pallas copy path, lane-aligned tensor (tiled kernel).
    y0 = get_arg(a, b, c, index=0, materialize=True)
    y0 = jax.block_until_ready(y0)
    assert y0.shape == a.shape
    assert jnp.array_equal(y0, a)

    # Opt-in Pallas copy path, ragged tensor (exercises the full-block tail kernel).
    y2 = get_arg(a, b, c, index=2, materialize=True)
    y2 = jax.block_until_ready(y2)
    assert y2.shape == c.shape
    assert jnp.array_equal(y2, c)

    # bf16 arg: dtype-aware sublane packing (16 sublanes).
    d = jax.random.normal(k0, (4, 8, 128), dtype=jnp.bfloat16)
    yd = get_arg(d, a, index=0, materialize=True)
    yd = jax.block_until_ready(yd)
    assert yd.shape == d.shape
    assert jnp.array_equal(yd, d)

    print("KERNEL_OK")
</pallas_src>

<mosaic_0001>
module attributes {stable_mosaic.version = 11 : i64} {
  func.func @_copy_kernel(%arg0: i32, %arg1: memref<16x128xf32, #tpu.memory_space<vmem>>, %arg2: memref<16x128xf32, #tpu.memory_space<vmem>>) attributes {dimension_semantics = [#tpu.dimension_semantics<parallel>], iteration_bounds = array<i64: 1>, scalar_prefetch = 0 : i64, scratch_operands = 0 : i64, tpu.core_type = #tpu.core_type<tc>, window_params = [{transform_indices = @transform_0, window_bounds = array<i64: 16, 128>}, {transform_indices = @transform_1, window_bounds = array<i64: 16, 128>}]} {
    %c0 = arith.constant 0 : index
    %c0_0 = arith.constant 0 : index
    %0 = vector.load %arg1[%c0, %c0_0] : memref<16x128xf32, #tpu.memory_space<vmem>>, vector<16x128xf32>
    %c0_1 = arith.constant 0 : index
    %c0_2 = arith.constant 0 : index
    %1 = vector.load %arg2[%c0_1, %c0_2] : memref<16x128xf32, #tpu.memory_space<vmem>>, vector<16x128xf32>
    tpu.vector_store %arg2[%c0_1, %c0_2], %0 {strides = array<i32>} : memref<16x128xf32, #tpu.memory_space<vmem>>, vector<16x128xf32>,
    return
  }
  func.func @transform_0(%arg0: i32) -> (i32, i32) {
    %c0_i32 = arith.constant 0 : i32
    %c0_i32_0 = arith.constant 0 : i32
    return %arg0, %c0_i32 : i32, i32
  }
  func.func @transform_1(%arg0: i32) -> (i32, i32) {
    %c0_i32 = arith.constant 0 : i32
    %c0_i32_0 = arith.constant 0 : i32
    return %arg0, %c0_i32 : i32, i32
  }
}

</mosaic_0001>

<llo_original>
// kernel: tpu_custom_call.1
$region0: #{tpu_custom_call.1}
  #allocation0 [shape = 'u32[]', space=smem, size = 0x4, offset = 0x4, fixed_abs, tag = 'smem constant byte address 0x4 - core index']
  #allocation1 [shape = 'u32[144,128]{1,0:T(1,128)}', space=vmem, size = 0x12000, scoped, tag = 'internal scratch']
  %s0 = inlined_call_operand.hbm [shape: f32[16,128], index: 0, kind: input, shape index: {}]
  %s1 = inlined_call_operand.hbm [shape: f32[16,128], index: 1, kind: output, shape index: {}]
  %s2 = sld [smem:[#allocation0]]
  $region18: #{tpu_custom_call.1} parent=0
    _
  %s4 = ssub.s32 1, %s2
  %s5 = scalar_select 0, %s4, %s2
  $region1: #{tpu_custom_call.1} parent=0
    #allocation2 [shape = 'u8[8192]{0}', space=vmem, size = 0x2000, scoped, tag = 'input window, operand 0, single buffered']
    #allocation3 [shape = 's32[1]{0}', space=sflag, size = 0x4, scoped, tag = 'scoped memory for tpu_custom_call.1']
    #allocation4 [shape = 's32[1]{0}', space=sflag, size = 0x4, scoped, tag = 'scoped memory for tpu_custom_call.1']
    #allocation5 [shape = 'u8[8192]{0}', space=vmem, size = 0x2000, scoped, tag = 'output window, operand 0, single buffered']
    %6 = vsyncpa [#allocation3], 0
    %7 = vsyncpa [#allocation4], 0
    // Predicated region
    $region2: #{tpu_custom_call.1} parent=1 // pred_check
      _
    $region3: #{tpu_custom_call.1} parent=1 // pred_check_branch
      %9 = sbr.rel (0) target = $region5
    $region4: #{tpu_custom_call.1} parent=1 // pred_region
      %s11 = ssub.s32 256, 256
      %12 = vsyncadd [#allocation3], %s11
      %s13 = sshll.u32 [#allocation2], 4
      %s14 = int_to_ptr.vmem [resolvable:$true] %s13
      %19 = dma.hbm_to_vmem [thread:$0]  %s0, 256, %s14, [#allocation3], 128, 128, 8
    $region5: #{tpu_custom_call.1} parent=1 // pred_fallthru
      _
    // Predicated region
    $region6: #{tpu_custom_call.1} parent=1 // pred_check
      _
    $region7: #{tpu_custom_call.1} parent=1 // pred_check_branch
      %21 = sbr.rel (0) target = $region9
    $region8: #{tpu_custom_call.1} parent=1 // pred_region
      %22 = dma.done [#allocation3], 256
    $region9: #{tpu_custom_call.1} parent=1 // pred_fallthru
      _
    %v23 = vld [vmem:[#allocation2] sm:$0xff]
    %v24 = vld [vmem:[#allocation2 + $0x8] sm:$0xff]
    %25 = vst [vmem:[#allocation5] sm:$0xff] %v23
    %26 = vst [vmem:[#allocation5 + $0x8] sm:$0xff] %v24
    // Predicated region
    $region10: #{tpu_custom_call.1} parent=1 // pred_check
      _
    $region11: #{tpu_custom_call.1} parent=1 // pred_check_branch
      %28 = sbr.rel (0) target = $region13
    $region12: #{tpu_custom_call.1} parent=1 // pred_region
      %s30 = ssub.s32 256, 256
      %31 = vsyncadd [#allocation4], %s30
      %s32 = sshll.u32 [#allocation5], 4
      %s33 = int_to_ptr.vmem [resolvable:$true] %s32
      %38 = dma.vmem_to_hbm [thread:$0]  %s33, 256, %s1, [#allocation4], 128, 128, 8
    $region13: #{tpu_custom_call.1} parent=1 // pred_fallthru
      _
    // Predicated region
    $region14: #{tpu_custom_call.1} parent=1 // pred_check
      _
    $region15: #{tpu_custom_call.1} parent=1 // pred_check_branch
      %40 = sbr.rel (0) target = $region17
    $region16: #{tpu_custom_call.1} parent=1 // pred_region
      %41 = dma.done [#allocation4], 256
    $region17: #{tpu_custom_call.1} parent=1 // pred_fallthru
      _
    %42 = vsyncpa [#allocation3], 1
    %43 = vsyncpa [#allocation4], 1

</llo_original>
